<compile_context>
chip_gen: v7x
topology: tpu7x:2x2x1
jax: 0.10.0
libtpu: 0.0.40
codegen_flags: <defaults>
</compile_context>

<pallas_src>
import functools

import jax
import jax.numpy as jnp
from jax import lax
from jax.experimental import pallas as pl
from jax.experimental.pallas import tpu as pltpu

BN_EPS = 1e-5
LANES = 128  # lane width of the packed weight slab and of the output slab


def _round_up(n, m):
    return (n + m - 1) // m * m


def _classic_tuner_kernel(temp, num_feats, capacity_range,
                          x_ref, bn_ref, wp_ref, noise_ref, out_ref):
    F = num_feats
    C = capacity_range
    F_pad = _round_up(F, 8)
    off_w1 = 8                      # rows [8, 8+F): w1 (F, :H used)
    off_w2 = off_w1 + F_pad         # rows [., .+128): w2 padded to 128 rows
    off_wh = off_w2 + LANES         # rows [., .+128): fused head weights

    x = x_ref[...]                  # (B, F) f32
    B = x.shape[0]

    # ---- BatchNorm1d (training mode: batch stats, biased variance) ----
    gamma = bn_ref[0:1, :]          # (1, F)
    beta = bn_ref[1:2, :]           # (1, F)
    mean = jnp.mean(x, axis=0, keepdims=True)
    var = jnp.maximum(jnp.mean(x * x, axis=0, keepdims=True) - mean * mean, 0.0)
    xn = (x - mean) * lax.rsqrt(var + BN_EPS) * gamma + beta

    # ---- in_layer -> ReLU -> Dropout(p=0) -> hidden Linear -> ReLU ----
    # All weights live lane-padded to 128; columns/rows beyond H are zero, so
    # activations stay as a single (B, 128) lane-dense vreg with no slicing.
    w1 = wp_ref[off_w1:off_w1 + F, :]                                   # (F, 128)
    b1 = wp_ref[0:1, :]                                                 # (1, 128)
    h = jnp.maximum(jnp.dot(xn, w1, preferred_element_type=jnp.float32) + b1, 0.0)
    w2 = wp_ref[off_w2:off_w2 + LANES, :]                               # (128, 128)
    b2 = wp_ref[1:2, :]
    h = jnp.maximum(jnp.dot(h, w2, preferred_element_type=jnp.float32) + b2, 0.0)

    # ---- fused heads: lane 0 = bits, lanes 1..C = t logits, C+1..C+2 = policy ----
    wh = wp_ref[off_wh:off_wh + LANES, :]                               # (128, 128)
    bh = wp_ref[2:3, :]
    z = jnp.dot(h, wh, preferred_element_type=jnp.float32) + bh        # (B, 128)

    # ---- gumbel_softmax for the t / policy segments (hard=False) ----
    g = noise_ref[...]                                   # (B, 128) standard Gumbel
    inv_temp = jnp.float32(1.0 / temp)
    zz = (z + g) * inv_temp
    lane = lax.broadcasted_iota(jnp.int32, (B, LANES), 1)
    neg_big = jnp.float32(-1e30)

    def seg_softmax(mask):
        zm = jnp.where(mask, zz, neg_big)
        m = jnp.max(zm, axis=-1, keepdims=True)
        e = jnp.where(mask, jnp.exp(zm - m), 0.0)
        s = jnp.sum(e, axis=-1, keepdims=True)
        return e / s

    # TODO(synk): hard=True straight-through (one-hot) gumbel_softmax and the
    #             'reinmax' categorical_mode are not implemented (module defaults used).
    t_soft = seg_softmax((lane >= 1) & (lane <= C))
    p_soft = seg_softmax((lane >= C + 1) & (lane <= C + 2))

    # bits passes through raw (no noise, no softmax); padding lanes are 0.
    out_ref[...] = jnp.where(lane == 0, z, 0.0) + t_soft + p_soft


def init_params(key, num_feats, capacity_range, hidden_width=32):
    """Synthetic init matching the module: xavier_normal_ Linear weights,
    PyTorch-default uniform biases, BatchNorm gamma=1 / beta=0."""
    F, H, C = num_feats, hidden_width, capacity_range

    def xavier(k, fan_in, fan_out):
        std = (2.0 / (fan_in + fan_out)) ** 0.5
        return std * jax.random.normal(k, (fan_in, fan_out), jnp.float32)

    def bias(k, fan_in, n):
        bound = 1.0 / (fan_in ** 0.5)
        return jax.random.uniform(k, (1, n), jnp.float32, -bound, bound)

    ks = jax.random.split(key, 10)
    return dict(
        gamma=jnp.ones((1, F), jnp.float32),
        beta=jnp.zeros((1, F), jnp.float32),
        w1=xavier(ks[0], F, H), b1=bias(ks[1], F, H),
        w2=xavier(ks[2], H, H), b2=bias(ks[3], H, H),
        wt=xavier(ks[4], H, C), bt=bias(ks[5], H, C),
        wb=xavier(ks[6], H, 1), bb=bias(ks[7], H, 1),
        wp=xavier(ks[8], H, 2), bp=bias(ks[9], H, 2),
    )


def pack_params(params, capacity_range):
    """One-time host-side packing of all weights/biases into a single lane-dense
    (R, 128) f32 slab (plus a tiny (2, F) BatchNorm array)."""
    F, H = params["w1"].shape
    C = capacity_range
    assert H <= LANES and (3 + C) <= LANES, "hidden_width / capacity_range too large"
    F_pad = _round_up(F, 8)

    vec = jnp.zeros((8, LANES), jnp.float32)
    vec = vec.at[0, :H].set(params["b1"][0])            # b1
    vec = vec.at[1, :H].set(params["b2"][0])            # b2
    vec = vec.at[2, 0].set(params["bb"][0, 0])          # fused head bias: bits
    vec = vec.at[2, 1:1 + C].set(params["bt"][0])       # t
    vec = vec.at[2, 1 + C:3 + C].set(params["bp"][0])   # policy

    w1b = jnp.zeros((F_pad, LANES), jnp.float32).at[:F, :H].set(params["w1"])
    w2b = jnp.zeros((LANES, LANES), jnp.float32).at[:H, :H].set(params["w2"])
    whb = jnp.zeros((LANES, LANES), jnp.float32)
    whb = whb.at[:H, 0:1].set(params["wb"])
    whb = whb.at[:H, 1:1 + C].set(params["wt"])
    whb = whb.at[:H, 1 + C:3 + C].set(params["wp"])

    wpack = jnp.concatenate([vec, w1b, w2b, whb], axis=0)       # (8+F_pad+256, 128)
    bn = jnp.concatenate([params["gamma"], params["beta"]], 0)  # (2, F)
    return bn, wpack


@functools.partial(jax.jit, static_argnames=("capacity_range", "temp"))
def classic_tuner_forward(x, bn, wpack, noise, *, capacity_range, temp=0.001):
    B, F = x.shape
    C = capacity_range
    kernel = functools.partial(_classic_tuner_kernel, float(temp), F, C)

    vmem = pl.BlockSpec(memory_space=pltpu.MemorySpace.VMEM)

    # TODO(synk): if run at production batch sizes, add a batch grid with
    # BlockSpecs + dimension_semantics=("parallel",) and hoist the BatchNorm
    # batch statistics out of the tiled axis (per-tile stats would be wrong).
    out = pl.pallas_call(
        kernel,
        out_shape=jax.ShapeDtypeStruct((B, LANES), jnp.float32),  # lane-dense slab
        in_specs=[vmem, vmem, vmem, vmem],
        out_specs=vmem,
    )(x, bn, wpack, noise)
    return out[:, :1 + C + 2]   # wrapper-side slice of the padded output is free


if __name__ == "__main__":
    key = jax.random.PRNGKey(0)
    k_param, k_x, k_noise = jax.random.split(key, 3)

    # small shapes consistent with the module
    B, num_feats, capacity_range, hidden_width = 8, 16, 8, 32

    params = init_params(k_param, num_feats, capacity_range, hidden_width)
    bn, wpack = pack_params(params, capacity_range)
    x = jax.random.normal(k_x, (B, num_feats), jnp.float32)
    # standard Gumbel noise for the gumbel_softmax heads, laid out lane-dense
    noise = jax.random.gumbel(k_noise, (B, LANES), jnp.float32)

    out = classic_tuner_forward(x, bn, wpack, noise,
                                capacity_range=capacity_range, temp=0.001)
    out = jax.block_until_ready(out)

    assert out.shape == (B, 1 + capacity_range + 2)
    assert bool(jnp.all(jnp.isfinite(out)))

    # sanity: bits column matches a pure-JAX reference (noise-free path)
    mean = x.mean(0, keepdims=True)
    var = ((x - mean) ** 2).mean(0, keepdims=True)
    xn = (x - mean) / jnp.sqrt(var + BN_EPS) * params["gamma"] + params["beta"]
    h = jnp.maximum(xn @ params["w1"] + params["b1"], 0.0)
    h = jnp.maximum(h @ params["w2"] + params["b2"], 0.0)
    bits_ref = h @ params["wb"] + params["bb"]
    assert bool(jnp.all(jnp.abs(out[:, :1] - bits_ref) < 5e-2))

    # sanity: each gumbel_softmax output is a probability simplex
    t_sum = jnp.sum(out[:, 1:1 + capacity_range], axis=-1)
    p_sum = jnp.sum(out[:, 1 + capacity_range:], axis=-1)
    assert bool(jnp.all(jnp.abs(t_sum - 1.0) < 1e-2))
    assert bool(jnp.all(jnp.abs(p_sum - 1.0) < 1e-2))

    print("KERNEL_OK")
</pallas_src>

<mosaic_0001>
module attributes {stable_mosaic.version = 11 : i64} {
  func.func @_classic_tuner_kernel(%arg0: memref<8x16xf32, #tpu.memory_space<vmem>>, %arg1: memref<2x16xf32, #tpu.memory_space<vmem>>, %arg2: memref<280x128xf32, #tpu.memory_space<vmem>>, %arg3: memref<8x128xf32, #tpu.memory_space<vmem>>, %arg4: memref<8x128xf32, #tpu.memory_space<vmem>>) attributes {dimension_semantics = [], scalar_prefetch = 0 : i64, scratch_operands = 0 : i64, tpu.core_type = #tpu.core_type<tc>} {
    %c0 = arith.constant 0 : index
    %c0_0 = arith.constant 0 : index
    %0 = vector.load %arg0[%c0, %c0_0] : memref<8x16xf32, #tpu.memory_space<vmem>>, vector<8x16xf32>
    %c0_1 = arith.constant 0 : index
    %c0_2 = arith.constant 0 : index
    %1 = vector.load %arg1[%c0_1, %c0_2] : memref<2x16xf32, #tpu.memory_space<vmem>>, vector<1x16xf32>
    %c1 = arith.constant 1 : index
    %c0_3 = arith.constant 0 : index
    %2 = vector.load %arg1[%c1, %c0_3] : memref<2x16xf32, #tpu.memory_space<vmem>>, vector<1x16xf32>
    %cst = arith.constant dense<0.000000e+00> : vector<16xf32>
    %3 = vector.multi_reduction <add>, %0, %cst [0] : vector<8x16xf32> to vector<16xf32>
    %4 = vector.shape_cast %3 : vector<16xf32> to vector<1x16xf32>
    %cst_4 = arith.constant 8.000000e+00 : f32
    %5 = vector.broadcast %cst_4 : f32 to vector<1x16xf32>
    %6 = arith.divf %4, %5 : vector<1x16xf32>
    %7 = arith.mulf %0, %0 : vector<8x16xf32>
    %cst_5 = arith.constant dense<0.000000e+00> : vector<16xf32>
    %8 = vector.multi_reduction <add>, %7, %cst_5 [0] : vector<8x16xf32> to vector<16xf32>
    %9 = vector.shape_cast %8 : vector<16xf32> to vector<1x16xf32>
    %cst_6 = arith.constant 8.000000e+00 : f32
    %10 = vector.broadcast %cst_6 : f32 to vector<1x16xf32>
    %11 = arith.divf %9, %10 : vector<1x16xf32>
    %12 = arith.mulf %6, %6 : vector<1x16xf32>
    %13 = arith.subf %11, %12 : vector<1x16xf32>
    %cst_7 = arith.constant 0.000000e+00 : f32
    %14 = vector.broadcast %cst_7 : f32 to vector<1x16xf32>
    %15 = arith.maximumf %13, %14 : vector<1x16xf32>
    %16 = vector.broadcast %6 : vector<1x16xf32> to vector<8x16xf32>
    %17 = arith.subf %0, %16 : vector<8x16xf32>
    %cst_8 = arith.constant 9.99999974E-6 : f32
    %18 = vector.broadcast %cst_8 : f32 to vector<1x16xf32>
    %19 = arith.addf %15, %18 : vector<1x16xf32>
    %20 = math.rsqrt %19 : vector<1x16xf32>
    %21 = vector.broadcast %20 : vector<1x16xf32> to vector<8x16xf32>
    %22 = arith.mulf %17, %21 : vector<8x16xf32>
    %23 = vector.broadcast %1 : vector<1x16xf32> to vector<8x16xf32>
    %24 = arith.mulf %22, %23 : vector<8x16xf32>
    %25 = vector.broadcast %2 : vector<1x16xf32> to vector<8x16xf32>
    %26 = arith.addf %24, %25 : vector<8x16xf32>
    %c8 = arith.constant 8 : index
    %c0_9 = arith.constant 0 : index
    %27 = vector.load %arg2[%c8, %c0_9] : memref<280x128xf32, #tpu.memory_space<vmem>>, vector<16x128xf32>
    %c0_10 = arith.constant 0 : index
    %c0_11 = arith.constant 0 : index
    %28 = vector.load %arg2[%c0_10, %c0_11] : memref<280x128xf32, #tpu.memory_space<vmem>>, vector<1x128xf32>
    %cst_12 = arith.constant dense<0.000000e+00> : vector<8x128xf32>
    %29 = tpu.matmul %26, %27, %cst_12 {dimension_numbers = #tpu.dot_dimension_numbers<[1], [0], [0], [1], [0, 0, 1, 1], [], []>} : vector<8x16xf32>, vector<16x128xf32>, vector<8x128xf32> -> vector<8x128xf32>
    %30 = vector.broadcast %28 : vector<1x128xf32> to vector<8x128xf32>
    %31 = arith.addf %29, %30 : vector<8x128xf32>
    %cst_13 = arith.constant 0.000000e+00 : f32
    %32 = vector.broadcast %cst_13 : f32 to vector<8x128xf32>
    %33 = arith.maximumf %31, %32 : vector<8x128xf32>
    %c24 = arith.constant 24 : index
    %c0_14 = arith.constant 0 : index
    %34 = vector.load %arg2[%c24, %c0_14] : memref<280x128xf32, #tpu.memory_space<vmem>>, vector<128x128xf32>
    %c1_15 = arith.constant 1 : index
    %c0_16 = arith.constant 0 : index
    %35 = vector.load %arg2[%c1_15, %c0_16] : memref<280x128xf32, #tpu.memory_space<vmem>>, vector<1x128xf32>
    %cst_17 = arith.constant dense<0.000000e+00> : vector<8x128xf32>
    %36 = tpu.matmul %33, %34, %cst_17 {dimension_numbers = #tpu.dot_dimension_numbers<[1], [0], [0], [1], [0, 0, 1, 1], [], []>} : vector<8x128xf32>, vector<128x128xf32>, vector<8x128xf32> -> vector<8x128xf32>
    %37 = vector.broadcast %35 : vector<1x128xf32> to vector<8x128xf32>
    %38 = arith.addf %36, %37 : vector<8x128xf32>
    %cst_18 = arith.constant 0.000000e+00 : f32
    %39 = vector.broadcast %cst_18 : f32 to vector<8x128xf32>
    %40 = arith.maximumf %38, %39 : vector<8x128xf32>
    %c152 = arith.constant 152 : index
    %c0_19 = arith.constant 0 : index
    %41 = vector.load %arg2[%c152, %c0_19] : memref<280x128xf32, #tpu.memory_space<vmem>>, vector<128x128xf32>
    %c2 = arith.constant 2 : index
    %c0_20 = arith.constant 0 : index
    %42 = vector.load %arg2[%c2, %c0_20] : memref<280x128xf32, #tpu.memory_space<vmem>>, vector<1x128xf32>
    %cst_21 = arith.constant dense<0.000000e+00> : vector<8x128xf32>
    %43 = tpu.matmul %40, %41, %cst_21 {dimension_numbers = #tpu.dot_dimension_numbers<[1], [0], [0], [1], [0, 0, 1, 1], [], []>} : vector<8x128xf32>, vector<128x128xf32>, vector<8x128xf32> -> vector<8x128xf32>
    %44 = vector.broadcast %42 : vector<1x128xf32> to vector<8x128xf32>
    %45 = arith.addf %43, %44 : vector<8x128xf32>
    %c0_22 = arith.constant 0 : index
    %c0_23 = arith.constant 0 : index
    %46 = vector.load %arg3[%c0_22, %c0_23] : memref<8x128xf32, #tpu.memory_space<vmem>>, vector<8x128xf32>
    %47 = arith.addf %45, %46 : vector<8x128xf32>
    %cst_24 = arith.constant 1.000000e+03 : f32
    %48 = vector.broadcast %cst_24 : f32 to vector<8x128xf32>
    %49 = arith.mulf %47, %48 : vector<8x128xf32>
    %50 = tpu.iota {dimensions = array<i32: 1>} : vector<8x128xi32>
    %c1_i32 = arith.constant 1 : i32
    %51 = vector.broadcast %c1_i32 : i32 to vector<8x128xi32>
    %52 = arith.cmpi sge, %50, %51 : vector<8x128xi32>
    %c8_i32 = arith.constant 8 : i32
    %53 = vector.broadcast %c8_i32 : i32 to vector<8x128xi32>
    %54 = arith.cmpi sle, %50, %53 : vector<8x128xi32>
    %55 = arith.andi %52, %54 : vector<8x128xi1>
    %cst_25 = arith.constant -1.000000e+30 : f32
    %56 = vector.broadcast %cst_25 : f32 to vector<8x128xf32>
    %57 = arith.select %55, %49, %56 : vector<8x128xi1>, vector<8x128xf32>
    %cst_26 = arith.constant dense<0xFF800000> : vector<8xf32>
    %58 = vector.multi_reduction <maximumf>, %57, %cst_26 [1] : vector<8x128xf32> to vector<8xf32>
    %59 = vector.shape_cast %58 : vector<8xf32> to vector<8x1xf32>
    %60 = vector.broadcast %59 : vector<8x1xf32> to vector<8x128xf32>
    %61 = arith.subf %57, %60 : vector<8x128xf32>
    %62 = math.exp %61 : vector<8x128xf32>
    %cst_27 = arith.constant 0.000000e+00 : f32
    %63 = vector.broadcast %cst_27 : f32 to vector<8x128xf32>
    %64 = arith.select %55, %62, %63 : vector<8x128xi1>, vector<8x128xf32>
    %cst_28 = arith.constant dense<0.000000e+00> : vector<8xf32>
    %65 = vector.multi_reduction <add>, %64, %cst_28 [1] : vector<8x128xf32> to vector<8xf32>
    %66 = vector.shape_cast %65 : vector<8xf32> to vector<8x1xf32>
    %67 = vector.broadcast %66 : vector<8x1xf32> to vector<8x128xf32>
    %68 = arith.divf %64, %67 : vector<8x128xf32>
    %c9_i32 = arith.constant 9 : i32
    %69 = vector.broadcast %c9_i32 : i32 to vector<8x128xi32>
    %70 = arith.cmpi sge, %50, %69 : vector<8x128xi32>
    %c10_i32 = arith.constant 10 : i32
    %71 = vector.broadcast %c10_i32 : i32 to vector<8x128xi32>
    %72 = arith.cmpi sle, %50, %71 : vector<8x128xi32>
    %73 = arith.andi %70, %72 : vector<8x128xi1>
    %cst_29 = arith.constant -1.000000e+30 : f32
    %74 = vector.broadcast %cst_29 : f32 to vector<8x128xf32>
    %75 = arith.select %73, %49, %74 : vector<8x128xi1>, vector<8x128xf32>
    %cst_30 = arith.constant dense<0xFF800000> : vector<8xf32>
    %76 = vector.multi_reduction <maximumf>, %75, %cst_30 [1] : vector<8x128xf32> to vector<8xf32>
    %77 = vector.shape_cast %76 : vector<8xf32> to vector<8x1xf32>
    %78 = vector.broadcast %77 : vector<8x1xf32> to vector<8x128xf32>
    %79 = arith.subf %75, %78 : vector<8x128xf32>
    %80 = math.exp %79 : vector<8x128xf32>
    %cst_31 = arith.constant 0.000000e+00 : f32
    %81 = vector.broadcast %cst_31 : f32 to vector<8x128xf32>
    %82 = arith.select %73, %80, %81 : vector<8x128xi1>, vector<8x128xf32>
    %cst_32 = arith.constant dense<0.000000e+00> : vector<8xf32>
    %83 = vector.multi_reduction <add>, %82, %cst_32 [1] : vector<8x128xf32> to vector<8xf32>
    %84 = vector.shape_cast %83 : vector<8xf32> to vector<8x1xf32>
    %85 = vector.broadcast %84 : vector<8x1xf32> to vector<8x128xf32>
    %86 = arith.divf %82, %85 : vector<8x128xf32>
    %c0_i32 = arith.constant 0 : i32
    %87 = vector.broadcast %c0_i32 : i32 to vector<8x128xi32>
    %88 = arith.cmpi eq, %50, %87 : vector<8x128xi32>
    %cst_33 = arith.constant 0.000000e+00 : f32
    %89 = vector.broadcast %cst_33 : f32 to vector<8x128xf32>
    %90 = arith.select %88, %45, %89 : vector<8x128xi1>, vector<8x128xf32>
    %91 = arith.addf %90, %68 : vector<8x128xf32>
    %92 = arith.addf %91, %86 : vector<8x128xf32>
    %c0_34 = arith.constant 0 : index
    %c0_35 = arith.constant 0 : index
    %93 = vector.load %arg4[%c0_34, %c0_35] : memref<8x128xf32, #tpu.memory_space<vmem>>, vector<8x128xf32>
    tpu.vector_store %arg4[%c0_34, %c0_35], %92 {strides = array<i32>} : memref<8x128xf32, #tpu.memory_space<vmem>>, vector<8x128xf32>,
    return
  }
}

</mosaic_0001>

<llo_original>
// kernel: classic_tuner_forward.1
$region0: #{classic_tuner_forward.1}
  #allocation0 [shape = 'u32[]', space=smem, size = 0x4, offset = 0x4, fixed_abs, tag = 'smem constant byte address 0x4 - core index']
  #allocation1 [shape = 'u32[144,128]{1,0:T(1,128)}', space=vmem, size = 0x12000, scoped, tag = 'internal scratch']
  %s0 = inlined_call_operand.hbm [shape: f32[8,16], index: 0, kind: input, shape index: {}]
  %s1 = inlined_call_operand.vmem [shape: f32[2,16], index: 1, kind: input, shape index: {}]
  %s2 = inlined_call_operand.hbm [shape: f32[280,128], index: 2, kind: input, shape index: {}]
  %s3 = inlined_call_operand.vmem [shape: f32[8,128], index: 3, kind: input, shape index: {}]
  %s4 = inlined_call_operand.hbm [shape: f32[8,128], index: 4, kind: output, shape index: {}]
  %s5 = sld [smem:[#allocation0]]
  $region34: #{classic_tuner_forward.1} parent=0
    _
  %s7 = ssub.s32 1, %s5
  %s8 = scalar_select 0, %s7, %s5
  $region1: #{classic_tuner_forward.1} parent=0
    #allocation2 [shape = 'u8[4096]{0}', space=vmem, size = 0x1000, scoped, tag = 'input window, operand 0, single buffered']
    #allocation3 [shape = 's32[1]{0}', space=sflag, size = 0x4, scoped, tag = 'scoped memory for classic_tuner_forward.1']
    #allocation4 [shape = 's32[1]{0}', space=sflag, size = 0x4, scoped, tag = 'scoped memory for classic_tuner_forward.1']
    #allocation5 [shape = 'u8[143360]{0}', space=vmem, size = 0x23000, scoped, tag = 'input window, operand 2, single buffered']
    #allocation6 [shape = 's32[1]{0}', space=sflag, size = 0x4, scoped, tag = 'scoped memory for classic_tuner_forward.1']
    #allocation7 [shape = 'u8[4096]{0}', space=vmem, size = 0x1000, scoped, tag = 'output window, operand 0, single buffered']
    %9 = vsyncpa [#allocation3], 0
    %10 = vsyncpa [#allocation6], 0
    %11 = vsyncpa [#allocation4], 0
    // Predicated region
    $region2: #{classic_tuner_forward.1} parent=1 // pred_check
      _
    $region3: #{classic_tuner_forward.1} parent=1 // pred_check_branch
      %13 = sbr.rel (0) target = $region5
    $region4: #{classic_tuner_forward.1} parent=1 // pred_region
      %s15 = ssub.s32 128, 128
      %16 = vsyncadd [#allocation3], %s15
      %s18 = sshll.u32 [#allocation2], 4
      %s19 = int_to_ptr.vmem [resolvable:$true] %s18
      %21 = dma.hbm_to_vmem [thread:$0]  %s0, 128, %s19, [#allocation3]
    $region5: #{classic_tuner_forward.1} parent=1 // pred_fallthru
      _
    // Predicated region
    $region6: #{classic_tuner_forward.1} parent=1 // pred_check
      _
    $region7: #{classic_tuner_forward.1} parent=1 // pred_check_branch
      %23 = sbr.rel (0) target = $region9
    $region8: #{classic_tuner_forward.1} parent=1 // pred_region
      _
    $region9: #{classic_tuner_forward.1} parent=1 // pred_fallthru
      _
    // Predicated region
    $region10: #{classic_tuner_forward.1} parent=1 // pred_check
      _
    $region11: #{classic_tuner_forward.1} parent=1 // pred_check_branch
      %25 = sbr.rel (0) target = $region13
    $region12: #{classic_tuner_forward.1} parent=1 // pred_region
      %s27 = ssub.s32 4480, 4480
      %28 = vsyncadd [#allocation6], %s27
      %s29 = sshll.u32 [#allocation5], 4
      %s30 = int_to_ptr.vmem [resolvable:$true] %s29
      %35 = dma.hbm_to_vmem [thread:$0]  %s2, 4480, %s30, [#allocation6], 128, 128, 8
    $region13: #{classic_tuner_forward.1} parent=1 // pred_fallthru
      _
    // Predicated region
    $region14: #{classic_tuner_forward.1} parent=1 // pred_check
      _
    $region15: #{classic_tuner_forward.1} parent=1 // pred_check_branch
      %37 = sbr.rel (0) target = $region17
    $region16: #{classic_tuner_forward.1} parent=1 // pred_region
      _
    $region17: #{classic_tuner_forward.1} parent=1 // pred_fallthru
      _
    // Predicated region
    $region18: #{classic_tuner_forward.1} parent=1 // pred_check
      _
    $region19: #{classic_tuner_forward.1} parent=1 // pred_check_branch
      %39 = sbr.rel (0) target = $region21
    $region20: #{classic_tuner_forward.1} parent=1 // pred_region
      %40 = dma.done [#allocation3], 128
    $region21: #{classic_tuner_forward.1} parent=1 // pred_fallthru
      _
    // Predicated region
    $region22: #{classic_tuner_forward.1} parent=1 // pred_check
      _
    $region23: #{classic_tuner_forward.1} parent=1 // pred_check_branch
      %42 = sbr.rel (0) target = $region25
    $region24: #{classic_tuner_forward.1} parent=1 // pred_region
      %43 = dma.done [#allocation6], 4480
    $region25: #{classic_tuner_forward.1} parent=1 // pred_fallthru
      _
    %v44 = vld [vmem:[#allocation2] sm:$0xff]
    %v45 = vld [vmem:[%s1] sm:$0x1]
    %v46 = vld [vmem:[%s1 + $0x1] sm:$0x1]
    %vm47 = vcmask 130048
    %v48 = vsel %vm47, %v44, 0.0
    %v49 = vrot.slane %v48, 4
    %v50 = vadd.f32 %v48, %v49
    %v51 = vrot.slane %v50, 2
    %v52 = vadd.f32 %v50, %v51
    %v53 = vrot.slane %v52, 1
    %v54 = vadd.f32 %v52, %v53
    %v55 = vrcp.pop 8.0
    %v56 = vmul.f32 %v54, %v55
    %v57 = vmul.f32 %v44, %v44
    %v58 = vsel %vm47, %v57, 0.0
    %v59 = vrot.slane %v58, 4
    %v60 = vadd.f32 %v58, %v59
    %v61 = vrot.slane %v60, 2
    %v62 = vadd.f32 %v60, %v61
    %v63 = vrot.slane %v62, 1
    %v64 = vadd.f32 %v62, %v63
    %v65 = vmul.f32 %v64, %v55
    %v66 = vmul.f32 %v56, %v56
    %v67 = vsub.f32 %v65, %v66
    %v68 = vmax.f32 %v67, 0.0
    %v69 = vsub.f32 %v44, %v56
    %v70 = vadd.f32 %v68, 1e-05
    %v71 = vrsqrt.pop %v70
    %v72 = vmul.f32 %v69, %v71
    %v73 = vlaneseq
    %v74 = vshrl.u32 %v73, 7
    %v75 = vsub.s32 0, %v74
    %v76 = vrot.slane %v45, %v75
    %v77 = vmul.f32 %v72, %v76
    %v78 = vlaneseq
    %v79 = vshrl.u32 %v78, 7
    %v80 = vsub.s32 0, %v79
    %v81 = vrot.slane %v46, %v80
    %v82 = vadd.f32 %v77, %v81
    %v83 = vld [vmem:[#allocation5 + $0x8] sm:$0xff]
    %v84 = vld [vmem:[#allocation5 + $0x10] sm:$0xff]
    %v85 = vld [vmem:[#allocation5] sm:$0x1]
    %v86 = vlaneseq
    %v87 = vshrl.u32 %v86, 7
    %v88 = vsub.s32 0, %v87
    %v89 = vrot.slane %v85, %v88
    %v91 = vsel %vm47, %v82, 0
    %93 = vmatprep.subr.mxu0 0.0
    %94 = vmatpush1.msra.mxu0 %v83
    %95 = vmatprep.subr.mxu0 0.0
    %96 = vmatpush1.msra.mxu0 %v84
    %97 = vmatprep.subr.mxu0 0.0
    %98 = vmatpush1.msra.mxu0 0.0
    %99 = vmatprep.subr.mxu0 0.0
    %100 = vmatpush1.msra.mxu0 0.0
    %101 = vmatprep.subr.mxu0 0.0
    %102 = vmatpush1.msra.mxu0 0.0
    %103 = vmatprep.subr.mxu0 0.0
    %104 = vmatpush1.msra.mxu0 0.0
    %105 = vmatprep.subr.mxu0 0.0
    %106 = vmatpush1.msra.mxu0 0.0
    %107 = vmatprep.subr.mxu0 0.0
    %108 = vmatpush1.msra.mxu0 0.0
    %109 = vmatprep.subr.mxu0 0.0
    %110 = vmatpush1.msra.mxu0 0.0
    %111 = vmatprep.subr.mxu0 0.0
    %112 = vmatpush1.msra.mxu0 0.0
    %113 = vmatprep.subr.mxu0 0.0
    %114 = vmatpush1.msra.mxu0 0.0
    %115 = vmatprep.subr.mxu0 0.0
    %116 = vmatpush1.msra.mxu0 0.0
    %117 = vmatprep.subr.mxu0 0.0
    %118 = vmatpush1.msra.mxu0 0.0
    %119 = vmatprep.subr.mxu0 0.0
    %120 = vmatpush1.msra.mxu0 0.0
    %121 = vmatprep.subr.mxu0 0.0
    %122 = vmatpush1.msra.mxu0 0.0
    %123 = vmatprep.subr.mxu0 0.0
    %124 = vmatpush1.msra.mxu0 0.0
    %125 = vmatprep.subr.mxu0 0.0
    %126 = vmatpush1.msra.mxu0 0.0
    %127 = vmatprep.subr.mxu0 0.0
    %128 = vmatpush1.msra.mxu0 0.0
    %129 = vmatprep.subr.mxu0 0.0
    %130 = vmatpush1.msra.mxu0 0.0
    %131 = vmatprep.subr.mxu0 0.0
    %132 = vmatpush1.msra.mxu0 0.0
    %133 = vmatprep.subr.mxu0 0.0
    %134 = vmatpush1.msra.mxu0 0.0
    %135 = vmatprep.subr.mxu0 0.0
    %136 = vmatpush1.msra.mxu0 0.0
    %137 = vmatprep.subr.mxu0 0.0
    %138 = vmatpush1.msra.mxu0 0.0
    %139 = vmatprep.subr.mxu0 0.0
    %140 = vmatpush1.msra.mxu0 0.0
    %141 = vmatprep.subr.mxu0 0.0
    %142 = vmatpush1.msra.mxu0 0.0
    %143 = vmatprep.subr.mxu0 0.0
    %144 = vmatpush1.msra.mxu0 0.0
    %145 = vmatprep.subr.mxu0 0.0
    %146 = vmatpush1.msra.mxu0 0.0
    %147 = vmatprep.subr.mxu0 0.0
    %148 = vmatpush1.msra.mxu0 0.0
    %149 = vmatprep.subr.mxu0 0.0
    %150 = vmatpush1.msra.mxu0 0.0
    %151 = vmatprep.subr.mxu0 0.0
    %152 = vmatpush1.msra.mxu0 0.0
    %153 = vmatprep.subr.mxu0 0.0
    %154 = vmatpush1.msra.mxu0 0.0
    %155 = vmatprep.subr.mxu0 0.0
    %156 = vmatpush1.msra.mxu0 0.0
    %157 = vmatprep.mubr.f32.mxu0 0.0
    %158 = vmatmul.mubr.f32.gmra.mrb[0].mxu0 %v91
    %v159 = vpop.f32.mrb[0].mxu0
    %v160 = vadd.f32 %v89, %v159
    %v161 = vpop.f32.mrb[0].mxu0
    %162 = vdwg.mxu0
    %v163 = vmax.f32 %v160, 0.0
    %v164 = vld [vmem:[#allocation5 + $0x18] sm:$0xff]
    %v165 = vld [vmem:[#allocation5 + $0x20] sm:$0xff]
    %v166 = vld [vmem:[#allocation5 + $0x28] sm:$0xff]
    %v167 = vld [vmem:[#allocation5 + $0x30] sm:$0xff]
    %v168 = vld [vmem:[#allocation5 + $0x38] sm:$0xff]
    %v169 = vld [vmem:[#allocation5 + $0x40] sm:$0xff]
    %v170 = vld [vmem:[#allocation5 + $0x48] sm:$0xff]
    %v171 = vld [vmem:[#allocation5 + $0x50] sm:$0xff]
    %v172 = vld [vmem:[#allocation5 + $0x58] sm:$0xff]
    %v173 = vld [vmem:[#allocation5 + $0x60] sm:$0xff]
    %v174 = vld [vmem:[#allocation5 + $0x68] sm:$0xff]
    %v175 = vld [vmem:[#allocation5 + $0x70] sm:$0xff]
    %v176 = vld [vmem:[#allocation5 + $0x78] sm:$0xff]
    %v177 = vld [vmem:[#allocation5 + $0x80] sm:$0xff]
    %v178 = vld [vmem:[#allocation5 + $0x88] sm:$0xff]
    %v179 = vld [vmem:[#allocation5 + $0x90] sm:$0xff]
    %v180 = vld [vmem:[#allocation5 + $0x1] sm:$0x1]
    %v181 = vlaneseq
    %v182 = vshrl.u32 %v181, 7
    %v183 = vsub.s32 0, %v182
    %v184 = vrot.slane %v180, %v183
    %185 = vmatprep.subr.mxu0 0.0
    %186 = vmatpush1.msra.mxu0 %v164
    %187 = vmatprep.subr.mxu0 0.0
    %188 = vmatpush1.msra.mxu0 %v165
    %189 = vmatprep.subr.mxu0 0.0
    %190 = vmatpush1.msra.mxu0 %v166
    %191 = vmatprep.subr.mxu0 0.0
    %192 = vmatpush1.msra.mxu0 %v167
    %193 = vmatprep.subr.mxu0 0.0
    %194 = vmatpush1.msra.mxu0 %v168
    %195 = vmatprep.subr.mxu0 0.0
    %196 = vmatpush1.msra.mxu0 %v169
    %197 = vmatprep.subr.mxu0 0.0
    %198 = vmatpush1.msra.mxu0 %v170
    %199 = vmatprep.subr.mxu0 0.0
    %200 = vmatpush1.msra.mxu0 %v171
    %201 = vmatprep.subr.mxu0 0.0
    %202 = vmatpush1.msra.mxu0 %v172
    %203 = vmatprep.subr.mxu0 0.0
    %204 = vmatpush1.msra.mxu0 %v173
    %205 = vmatprep.subr.mxu0 0.0
    %206 = vmatpush1.msra.mxu0 %v174
    %207 = vmatprep.subr.mxu0 0.0
    %208 = vmatpush1.msra.mxu0 %v175
    %209 = vmatprep.subr.mxu0 0.0
    %210 = vmatpush1.msra.mxu0 %v176
    %211 = vmatprep.subr.mxu0 0.0
    %212 = vmatpush1.msra.mxu0 %v177
    %213 = vmatprep.subr.mxu0 0.0
    %214 = vmatpush1.msra.mxu0 %v178
    %215 = vmatprep.subr.mxu0 0.0
    %216 = vmatpush1.msra.mxu0 %v179
    %217 = vmatprep.subr.mxu0 0.0
    %218 = vmatpush1.msra.mxu0 0.0
    %219 = vmatprep.subr.mxu0 0.0
    %220 = vmatpush1.msra.mxu0 0.0
    %221 = vmatprep.subr.mxu0 0.0
    %222 = vmatpush1.msra.mxu0 0.0
    %223 = vmatprep.subr.mxu0 0.0
    %224 = vmatpush1.msra.mxu0 0.0
    %225 = vmatprep.subr.mxu0 0.0
    %226 = vmatpush1.msra.mxu0 0.0
    %227 = vmatprep.subr.mxu0 0.0
    %228 = vmatpush1.msra.mxu0 0.0
    %229 = vmatprep.subr.mxu0 0.0
    %230 = vmatpush1.msra.mxu0 0.0
    %231 = vmatprep.subr.mxu0 0.0
    %232 = vmatpush1.msra.mxu0 0.0
    %233 = vmatprep.subr.mxu0 0.0
    %234 = vmatpush1.msra.mxu0 0.0
    %235 = vmatprep.subr.mxu0 0.0
    %236 = vmatpush1.msra.mxu0 0.0
    %237 = vmatprep.subr.mxu0 0.0
    %238 = vmatpush1.msra.mxu0 0.0
    %239 = vmatprep.subr.mxu0 0.0
    %240 = vmatpush1.msra.mxu0 0.0
    %241 = vmatprep.subr.mxu0 0.0
    %242 = vmatpush1.msra.mxu0 0.0
    %243 = vmatprep.subr.mxu0 0.0
    %244 = vmatpush1.msra.mxu0 0.0
    %245 = vmatprep.subr.mxu0 0.0
    %246 = vmatpush1.msra.mxu0 0.0
    %247 = vmatprep.subr.mxu0 0.0
    %248 = vmatpush1.msra.mxu0 0.0
    %249 = vmatprep.mubr.f32.mxu0 0.0
    %250 = vmatmul.mubr.f32.gmra.mrb[0].mxu0 %v163
    %v251 = vpop.f32.mrb[0].mxu0
    %v252 = vadd.f32 %v184, %v251
    %v253 = vpop.f32.mrb[0].mxu0
    %254 = vdwg.mxu0
    %v255 = vmax.f32 %v252, 0.0
    %v256 = vld [vmem:[#allocation5 + $0x98] sm:$0xff]
    %v257 = vld [vmem:[#allocation5 + $0xa0] sm:$0xff]
    %v258 = vld [vmem:[#allocation5 + $0xa8] sm:$0xff]
    %v259 = vld [vmem:[#allocation5 + $0xb0] sm:$0xff]
    %v260 = vld [vmem:[#allocation5 + $0xb8] sm:$0xff]
    %v261 = vld [vmem:[#allocation5 + $0xc0] sm:$0xff]
    %v262 = vld [vmem:[#allocation5 + $0xc8] sm:$0xff]
    %v263 = vld [vmem:[#allocation5 + $0xd0] sm:$0xff]
    %v264 = vld [vmem:[#allocation5 + $0xd8] sm:$0xff]
    %v265 = vld [vmem:[#allocation5 + $0xe0] sm:$0xff]
    %v266 = vld [vmem:[#allocation5 + $0xe8] sm:$0xff]
    %v267 = vld [vmem:[#allocation5 + $0xf0] sm:$0xff]
    %v268 = vld [vmem:[#allocation5 + $0xf8] sm:$0xff]
    %v269 = vld [vmem:[#allocation5 + $0x100] sm:$0xff]
    %v270 = vld [vmem:[#allocation5 + $0x108] sm:$0xff]
    %v271 = vld [vmem:[#allocation5 + $0x110] sm:$0xff]
    %v272 = vld [vmem:[#allocation5 + $0x2] sm:$0x1]
    %v273 = vlaneseq
    %v274 = vshrl.u32 %v273, 7
    %v275 = vsub.s32 0, %v274
    %v276 = vrot.slane %v272, %v275
    %277 = vmatprep.subr.mxu0 0.0
    %278 = vmatpush1.msra.mxu0 %v256
    %279 = vmatprep.subr.mxu0 0.0
    %280 = vmatpush1.msra.mxu0 %v257
    %281 = vmatprep.subr.mxu0 0.0
    %282 = vmatpush1.msra.mxu0 %v258
    %283 = vmatprep.subr.mxu0 0.0
    %284 = vmatpush1.msra.mxu0 %v259
    %285 = vmatprep.subr.mxu0 0.0
    %286 = vmatpush1.msra.mxu0 %v260
    %287 = vmatprep.subr.mxu0 0.0
    %288 = vmatpush1.msra.mxu0 %v261
    %289 = vmatprep.subr.mxu0 0.0
    %290 = vmatpush1.msra.mxu0 %v262
    %291 = vmatprep.subr.mxu0 0.0
    %292 = vmatpush1.msra.mxu0 %v263
    %293 = vmatprep.subr.mxu0 0.0
    %294 = vmatpush1.msra.mxu0 %v264
    %295 = vmatprep.subr.mxu0 0.0
    %296 = vmatpush1.msra.mxu0 %v265
    %297 = vmatprep.subr.mxu0 0.0
    %298 = vmatpush1.msra.mxu0 %v266
    %299 = vmatprep.subr.mxu0 0.0
    %300 = vmatpush1.msra.mxu0 %v267
    %301 = vmatprep.subr.mxu0 0.0
    %302 = vmatpush1.msra.mxu0 %v268
    %303 = vmatprep.subr.mxu0 0.0
    %304 = vmatpush1.msra.mxu0 %v269
    %305 = vmatprep.subr.mxu0 0.0
    %306 = vmatpush1.msra.mxu0 %v270
    %307 = vmatprep.subr.mxu0 0.0
    %308 = vmatpush1.msra.mxu0 %v271
    %309 = vmatprep.subr.mxu0 0.0
    %310 = vmatpush1.msra.mxu0 0.0
    %311 = vmatprep.subr.mxu0 0.0
    %312 = vmatpush1.msra.mxu0 0.0
    %313 = vmatprep.subr.mxu0 0.0
    %314 = vmatpush1.msra.mxu0 0.0
    %315 = vmatprep.subr.mxu0 0.0
    %316 = vmatpush1.msra.mxu0 0.0
    %317 = vmatprep.subr.mxu0 0.0
    %318 = vmatpush1.msra.mxu0 0.0
    %319 = vmatprep.subr.mxu0 0.0
    %320 = vmatpush1.msra.mxu0 0.0
    %321 = vmatprep.subr.mxu0 0.0
    %322 = vmatpush1.msra.mxu0 0.0
    %323 = vmatprep.subr.mxu0 0.0
    %324 = vmatpush1.msra.mxu0 0.0
    %325 = vmatprep.subr.mxu0 0.0
    %326 = vmatpush1.msra.mxu0 0.0
    %327 = vmatprep.subr.mxu0 0.0
    %328 = vmatpush1.msra.mxu0 0.0
    %329 = vmatprep.subr.mxu0 0.0
    %330 = vmatpush1.msra.mxu0 0.0
    %331 = vmatprep.subr.mxu0 0.0
    %332 = vmatpush1.msra.mxu0 0.0
    %333 = vmatprep.subr.mxu0 0.0
    %334 = vmatpush1.msra.mxu0 0.0
    %335 = vmatprep.subr.mxu0 0.0
    %336 = vmatpush1.msra.mxu0 0.0
    %337 = vmatprep.subr.mxu0 0.0
    %338 = vmatpush1.msra.mxu0 0.0
    %339 = vmatprep.subr.mxu0 0.0
    %340 = vmatpush1.msra.mxu0 0.0
    %341 = vmatprep.mubr.f32.mxu0 0.0
    %342 = vmatmul.mubr.f32.gmra.mrb[0].mxu0 %v255
    %v343 = vpop.f32.mrb[0].mxu0
    %v344 = vadd.f32 %v276, %v343
    %v345 = vpop.f32.mrb[0].mxu0
    %346 = vdwg.mxu0
    %v347 = vld [vmem:[%s3] sm:$0xff]
    %v348 = vadd.f32 %v344, %v347
    %v349 = vmul.f32 %v348, 1000.0
    %v350 = vlaneseq
    %v351 = vand.u32 %v350, 127
    %vm352 = vcmp.ge.s32.totalorder %v351, 1
    %vm353 = vcmp.le.s32.totalorder %v351, 8
    %vm354 = vmand %vm352, %vm353
    %v355 = vsel %vm354, %v349, -1e+30
    %356 = vmax.xlane.f32.xlu0 %v355
    %v357 = vpop.xlane.xlu0 %356
    %v358 = vsub.f32 %v355, %v357
    %v359 = vmul.f32 %v358, 1.442695
    %v360 = vpow.pop %v359
    %v361 = vsel %vm354, %v360, 0.0
    %362 = vadd.xlane.f32.xlu0 %v361
    %v363 = vpop.xlane.xlu0 %362
    %v364 = vrcp.pop %v363
    %v365 = vmul.f32 %v361, %v364
    %vm366 = vcmp.ge.s32.totalorder %v351, 9
    %vm367 = vcmp.le.s32.totalorder %v351, 10
    %vm368 = vmand %vm366, %vm367
    %v369 = vsel %vm368, %v349, -1e+30
    %370 = vmax.xlane.f32.xlu0 %v369
    %v371 = vpop.xlane.xlu0 %370
    %v372 = vsub.f32 %v369, %v371
    %v373 = vmul.f32 %v372, 1.442695
    %v374 = vpow.pop %v373
    %v375 = vsel %vm368, %v374, 0.0
    %376 = vadd.xlane.f32.xlu0 %v375
    %v377 = vpop.xlane.xlu0 %376
    %v378 = vrcp.pop %v377
    %v379 = vmul.f32 %v375, %v378
    %vm380 = vcmp.eq.s32.totalorder %v351, 0
    %v381 = vsel %vm380, %v344, 0.0
    %v382 = vadd.f32 %v381, %v365
    %v383 = vadd.f32 %v382, %v379
    %384 = vst [vmem:[#allocation7] sm:$0xff] %v383
    // Predicated region
    $region26: #{classic_tuner_forward.1} parent=1 // pred_check
      _
    $region27: #{classic_tuner_forward.1} parent=1 // pred_check_branch
      %386 = sbr.rel (0) target = $region29
    $region28: #{classic_tuner_forward.1} parent=1 // pred_region
      %s388 = ssub.s32 128, 128
      %389 = vsyncadd [#allocation4], %s388
      %s391 = sshll.u32 [#allocation7], 4
      %s392 = int_to_ptr.vmem [resolvable:$true] %s391
      %394 = dma.vmem_to_hbm [thread:$0]  %s392, 128, %s4, [#allocation4]
    $region29: #{classic_tuner_forward.1} parent=1 // pred_fallthru
      _
    // Predicated region
    $region30: #{classic_tuner_forward.1} parent=1 // pred_check
      _
    $region31: #{classic_tuner_forward.1} parent=1 // pred_check_branch
      %396 = sbr.rel (0) target = $region33
    $region32: #{classic_tuner_forward.1} parent=1 // pred_region
      %397 = dma.done [#allocation4], 128
    $region33: #{classic_tuner_forward.1} parent=1 // pred_fallthru
      _
    %398 = vsyncpa [#allocation3], 1
    %399 = vsyncpa [#allocation6], 1
    %400 = vsyncpa [#allocation4], 1

</llo_original>
